<compile_context>
chip_gen: v6e
topology: v6e:2x2x1
jax: 0.10.0
libtpu: 0.0.40
codegen_flags: <defaults>
</compile_context>

<pallas_src>
import math

import jax
import jax.numpy as jnp
from jax.experimental import pallas as pl
from jax.experimental.pallas import tpu as pltpu


_GELU_C = math.sqrt(2.0 / math.pi)


def _gelu_tanh(x):
    # 0.5 * x * (1 + tanh(sqrt(2/pi) * (x + 0.044715 x^3))), computed in f32.
    # (For D <~ 256 on v6e/v7x the EUP tanh can bind; a bf16 tanh would ~2x it,
    #  but f32 is kept here to preserve the module's numerics.)
    return 0.5 * x * (1.0 + jnp.tanh(_GELU_C * (x + 0.044715 * x * x * x)))


def _round_up(n, m):
    return ((n + m - 1) // m) * m


def _vmem_limit_bytes():
    """Scoped-VMEM budget: 3/4 of physical VMEM, capped at 100 MiB.

    v5e/v6e (128 MiB physical) -> 96 MiB; v7x (64 MiB physical) -> 48 MiB.
    """
    try:
        cap = int(pltpu.get_tpu_info().vmem_capacity_bytes)
    except Exception:  # interpret mode / older runtimes: conservative default
        cap = 64 * 1024 * 1024
    return int(min(cap * 3 // 4, 100 * 1024 * 1024))


def _choose_tm(M, tile_m):
    """Token-axis tile."""
    if M < 256:
        return M  # single full-extent block (full-dim blocks are always layout-legal)
    # At least 2 blocks so both v7x TensorCores get work; 128-row aligned.
    half = _round_up(pl.cdiv(M, 2), 128)
    return max(128, min(_round_up(tile_m, 128), half))


def _fits_resident(D, H, tm, budget):
    """Rough VMEM estimate for the fully-resident-weight path."""
    weights = 2 * D * H * 2                  # W1 + W2, bf16, single-buffered
    biases = 2 * (H + D) * 4                 # f32, single-buffered
    x_io = 2 * tm * D * 4                    # x tile, f32, double-buffered
    out_io = 2 * tm * D * 4                  # out tile, f32, double-buffered
    interm = tm * H * 6 + tm * D * 2         # hidden (f32 + bf16) + x bf16
    return (weights + biases + x_io + out_io + interm) <= 0.7 * budget


def _choose_th(H, D, tm, budget, max_th):
    """Hidden-axis tile for the streaming path; must divide H exactly."""
    # Bytes independent of th (x/out tiles, f32 accumulator, b2):
    fixed = (2 + 2 + 1) * tm * D * 4 + 2 * D * 4
    # Bytes per hidden column (W1 col + W2 row bf16 double-buffered, b1, hid f32+bf16):
    per_col = 2 * (2 * D * 2) + 2 * 4 + tm * 6
    th = max(128, int((0.7 * budget - fixed) // per_col))
    th = (th // 128) * 128
    if max_th is not None:
        th = min(th, max_th)
    if H <= th:
        return H
    while th >= 128:
        if H % th == 0:  # exact divisor so the H-reduction never touches padded columns
            return th
        th -= 128
    return H  # pathological H: fall back to un-tiled weights (correct, VMEM-tight)


# ---------------------------------------------------------------------------
# Kernels
# ---------------------------------------------------------------------------

def _ffn_kernel_resident(x_ref, w1_ref, b1_ref, w2_ref, b2_ref, o_ref):
    # x_ref: (tm, D) input dtype   w1_ref: (D, H) bf16   b1_ref: (1, H) f32
    # w2_ref: (H, D) bf16          b2_ref: (1, D) f32    o_ref: (tm, D)
    xb = x_ref[...].astype(jnp.bfloat16)                      # in-kernel cast (VPU)
    h = jnp.dot(xb, w1_ref[...], preferred_element_type=jnp.float32)
    h = _gelu_tanh(h + b1_ref[...])                           # bias + GELU in f32
    out = jnp.dot(h.astype(jnp.bfloat16), w2_ref[...],        # bf16 MXU, f32 acc
                  preferred_element_type=jnp.float32) + b2_ref[...]
    o_ref[...] = out.astype(o_ref.dtype)


def _ffn_kernel_stream_h(x_ref, w1_ref, b1_ref, w2_ref, b2_ref, o_ref, acc_ref):
    # Streaming over the hidden axis: grid = (M tiles, H tiles), H innermost.
    hi = pl.program_id(1)

    @pl.when(hi == 0)
    def _init():
        acc_ref[...] = jnp.zeros_like(acc_ref)

    xb = x_ref[...].astype(jnp.bfloat16)
    h = jnp.dot(xb, w1_ref[...], preferred_element_type=jnp.float32)
    h = _gelu_tanh(h + b1_ref[...])
    acc_ref[...] += jnp.dot(h.astype(jnp.bfloat16), w2_ref[...],
                            preferred_element_type=jnp.float32)

    @pl.when(hi == pl.num_programs(1) - 1)
    def _finalize():
        o_ref[...] = (acc_ref[...] + b2_ref[...]).astype(o_ref.dtype)


# ---------------------------------------------------------------------------
# Wrappers
# ---------------------------------------------------------------------------

def prepare_ffn_params(w1, b1, w2, b2):
    """One-time parameter prep (do NOT redo per call): bf16 weights, 2-D f32 biases."""
    return (w1.astype(jnp.bfloat16),
            jnp.asarray(b1, jnp.float32).reshape(1, -1),
            w2.astype(jnp.bfloat16),
            jnp.asarray(b2, jnp.float32).reshape(1, -1))


def feed_forward(x, w1, b1, w2, b2, *, tile_m=512, out_dtype=None,
                 force_stream_h=False, max_th=None):
    """out = GELU(x @ W1 + b1) @ W2 + b2.  x: [batch, seq, D]."""
    batch, seq, D = x.shape
    H = w1.shape[-1]
    M = batch * seq
    out_dtype = x.dtype if out_dtype is None else out_dtype

    # Prefer params from prepare_ffn_params(); only re-cast if the caller didn't.
    if w1.dtype != jnp.bfloat16:
        w1 = w1.astype(jnp.bfloat16)
    if w2.dtype != jnp.bfloat16:
        w2 = w2.astype(jnp.bfloat16)
    b1 = jnp.asarray(b1, jnp.float32).reshape(1, H)
    b2 = jnp.asarray(b2, jnp.float32).reshape(1, D)

    x2d = x.reshape(M, D)                    # no pad, no dtype pass over x in HBM
    tm = _choose_tm(M, tile_m)
    grid_m = pl.cdiv(M, tm)                  # partial last block: reads undefined rows
    budget = _vmem_limit_bytes()             #   (row-confined), OOB writes are masked.

    resident = (not force_stream_h) and _fits_resident(D, H, tm, budget)

    if resident:
        call = pl.pallas_call(
            _ffn_kernel_resident,
            out_shape=jax.ShapeDtypeStruct((M, D), out_dtype),
            grid_spec=pltpu.PrefetchScalarGridSpec(
                num_scalar_prefetch=0,
                grid=(grid_m,),
                in_specs=[
                    pl.BlockSpec((tm, D), lambda i: (i, 0)),   # x tile (pipelined)
                    # Constant index maps -> single-buffer the resident weights/biases.
                    pl.BlockSpec((D, H), lambda i: (0, 0),
                                 pipeline_mode=pl.Buffered(1)),
                    pl.BlockSpec((1, H), lambda i: (0, 0),
                                 pipeline_mode=pl.Buffered(1)),
                    pl.BlockSpec((H, D), lambda i: (0, 0),
                                 pipeline_mode=pl.Buffered(1)),
                    pl.BlockSpec((1, D), lambda i: (0, 0),
                                 pipeline_mode=pl.Buffered(1)),
                ],
                out_specs=pl.BlockSpec((tm, D), lambda i: (i, 0)),
            ),
            compiler_params=pltpu.CompilerParams(
                dimension_semantics=("parallel",),
                vmem_limit_bytes=budget),
        )
    else:
        th = _choose_th(H, D, tm, budget, max_th)
        grid_h = H // th
        call = pl.pallas_call(
            _ffn_kernel_stream_h,
            out_shape=jax.ShapeDtypeStruct((M, D), out_dtype),
            grid_spec=pltpu.PrefetchScalarGridSpec(
                num_scalar_prefetch=0,
                grid=(grid_m, grid_h),
                in_specs=[
                    pl.BlockSpec((tm, D), lambda i, h: (i, 0)),  # x (revisited over h)
                    pl.BlockSpec((D, th), lambda i, h: (0, h)),  # W1 column block
                    pl.BlockSpec((1, th), lambda i, h: (0, h)),  # b1 slice
                    pl.BlockSpec((th, D), lambda i, h: (h, 0)),  # W2 row block
                    pl.BlockSpec((1, D), lambda i, h: (0, 0),
                                 pipeline_mode=pl.Buffered(1)),  # b2 (constant)
                ],
                out_specs=pl.BlockSpec((tm, D), lambda i, h: (i, 0)),
                scratch_shapes=[pltpu.VMEM((tm, D), jnp.float32)],
            ),
            compiler_params=pltpu.CompilerParams(
                dimension_semantics=("parallel", "arbitrary"),
                vmem_limit_bytes=budget),
        )

    out2d = call(x2d, w1, b1, w2, b2)
    return out2d.reshape(batch, seq, D)


def reference_ffn(x, w1_bf, b1, w2_bf, b2):
    # Matches the kernel's precision choices (bf16 MXU operands, f32 elsewhere)
    # so the check isolates kernel plumbing rather than bf16 rounding.
    xf = x.astype(jnp.bfloat16).astype(jnp.float32)
    w1f = w1_bf.astype(jnp.float32)
    w2f = w2_bf.astype(jnp.float32)
    h = jnp.einsum("bsd,dh->bsh", xf, w1f, precision="highest") + b1
    h = _gelu_tanh(h)
    hb = h.astype(jnp.bfloat16).astype(jnp.float32)   # kernel also feeds bf16 h to MXU #2
    return jnp.einsum("bsh,hd->bsd", hb, w2f, precision="highest") + b2


if __name__ == "__main__":
    key = jax.random.PRNGKey(0)
    keys = jax.random.split(key, 10)

    def make_params(kw1, kb1, kw2, kb2, D):
        H = 4 * D
        lim1 = 1.0 / math.sqrt(D)
        lim2 = 1.0 / math.sqrt(H)
        w1 = jax.random.uniform(kw1, (D, H), jnp.float32, -lim1, lim1)
        b1 = jax.random.uniform(kb1, (H,), jnp.float32, -lim1, lim1)
        w2 = jax.random.uniform(kw2, (H, D), jnp.float32, -lim2, lim2)
        b2 = jax.random.uniform(kb2, (D,), jnp.float32, -lim2, lim2)
        return w1, b1, w2, b2

    # --- Config A: cfg['dim_embed'] = 32 -> hidden = 128 ---
    D = 32
    w1, b1, w2, b2 = make_params(keys[0], keys[1], keys[2], keys[3], D)
    params = prepare_ffn_params(w1, b1, w2, b2)   # bf16 weight cast hoisted out of calls

    # Case 1: batch=2, seq=8 (M=16): single block, resident-weight fast path.
    x = jax.random.normal(keys[4], (2, 8, D), dtype=jnp.float32)
    out = feed_forward(x, *params)
    jax.block_until_ready(out)
    ref = reference_ffn(x, *params)
    assert out.shape == x.shape
    assert jnp.allclose(out, ref, atol=5e-3, rtol=5e-3), "mismatch vs reference (case 1)"

    # Case 2: batch=4, seq=75 (M=300): two 128-aligned token blocks (v7x megacore)
    # with a masked partial last block; still the resident-weight path.
    x2 = jax.random.normal(keys[5], (4, 75, D), dtype=jnp.float32)
    out2 = feed_forward(x2, *params)
    jax.block_until_ready(out2)
    ref2 = reference_ffn(x2, *params)
    assert out2.shape == x2.shape
    assert jnp.allclose(out2, ref2, atol=5e-3, rtol=5e-3), "mismatch vs reference (case 2)"

    # --- Config B: dim_embed = 64 -> hidden = 256; force the H-streaming path
    # (the "weights don't fit VMEM" branch) with th=128 -> 2 reduction steps. ---
    D2 = 64
    w1b, b1b, w2b, b2b = make_params(keys[6], keys[7], keys[8], keys[9], D2)
    params_b = prepare_ffn_params(w1b, b1b, w2b, b2b)
    x3 = jax.random.normal(keys[4], (2, 16, D2), dtype=jnp.float32)
    out3 = feed_forward(x3, *params_b, force_stream_h=True, max_th=128)
    jax.block_until_ready(out3)
    ref3 = reference_ffn(x3, *params_b)
    assert out3.shape == x3.shape
    assert jnp.allclose(out3, ref3, atol=5e-3, rtol=5e-3), "mismatch vs reference (case 3)"

    print("KERNEL_OK")
</pallas_src>

<mosaic_0001>
module attributes {stable_mosaic.version = 11 : i64} {
  func.func @_ffn_kernel_resident(%arg0: i32, %arg1: memref<16x32xf32, #tpu.memory_space<vmem>>, %arg2: memref<32x128xbf16, #tpu.memory_space<vmem>>, %arg3: memref<1x128xf32, #tpu.memory_space<vmem>>, %arg4: memref<128x32xbf16, #tpu.memory_space<vmem>>, %arg5: memref<1x32xf32, #tpu.memory_space<vmem>>, %arg6: memref<16x32xf32, #tpu.memory_space<vmem>>) attributes {dimension_semantics = [#tpu.dimension_semantics<parallel>], iteration_bounds = array<i64: 1>, scalar_prefetch = 0 : i64, scratch_operands = 0 : i64, tpu.core_type = #tpu.core_type<tc>, window_params = [{transform_indices = @transform_0, window_bounds = array<i64: 16, 32>}, {pipeline_mode = #tpu.pipeline_mode<synchronous>, transform_indices = @transform_1, window_bounds = array<i64: 32, 128>}, {pipeline_mode = #tpu.pipeline_mode<synchronous>, transform_indices = @transform_2, window_bounds = array<i64: 1, 128>}, {pipeline_mode = #tpu.pipeline_mode<synchronous>, transform_indices = @transform_3, window_bounds = array<i64: 128, 32>}, {pipeline_mode = #tpu.pipeline_mode<synchronous>, transform_indices = @transform_4, window_bounds = array<i64: 1, 32>}, {transform_indices = @transform_5, window_bounds = array<i64: 16, 32>}]} {
    %c0 = arith.constant 0 : index
    %c0_0 = arith.constant 0 : index
    %0 = vector.load %arg1[%c0, %c0_0] : memref<16x32xf32, #tpu.memory_space<vmem>>, vector<16x32xf32>
    %1 = arith.truncf %0 : vector<16x32xf32> to vector<16x32xbf16>
    %c0_1 = arith.constant 0 : index
    %c0_2 = arith.constant 0 : index
    %2 = vector.load %arg2[%c0_1, %c0_2] : memref<32x128xbf16, #tpu.memory_space<vmem>>, vector<32x128xbf16>
    %cst = arith.constant dense<0.000000e+00> : vector<16x128xf32>
    %3 = tpu.matmul %1, %2, %cst {dimension_numbers = #tpu.dot_dimension_numbers<[1], [0], [0], [1], [0, 0, 1, 1], [], []>} : vector<16x32xbf16>, vector<32x128xbf16>, vector<16x128xf32> -> vector<16x128xf32>
    %c0_3 = arith.constant 0 : index
    %c0_4 = arith.constant 0 : index
    %4 = vector.load %arg3[%c0_3, %c0_4] : memref<1x128xf32, #tpu.memory_space<vmem>>, vector<1x128xf32>
    %5 = vector.broadcast %4 : vector<1x128xf32> to vector<16x128xf32>
    %6 = arith.addf %3, %5 : vector<16x128xf32>
    %cst_5 = arith.constant 5.000000e-01 : f32
    %7 = vector.broadcast %cst_5 : f32 to vector<16x128xf32>
    %8 = arith.mulf %7, %6 : vector<16x128xf32>
    %cst_6 = arith.constant 4.471500e-02 : f32
    %9 = vector.broadcast %cst_6 : f32 to vector<16x128xf32>
    %10 = arith.mulf %9, %6 : vector<16x128xf32>
    %11 = arith.mulf %10, %6 : vector<16x128xf32>
    %12 = arith.mulf %11, %6 : vector<16x128xf32>
    %13 = arith.addf %6, %12 : vector<16x128xf32>
    %cst_7 = arith.constant 0.797884583 : f32
    %14 = vector.broadcast %cst_7 : f32 to vector<16x128xf32>
    %15 = arith.mulf %14, %13 : vector<16x128xf32>
    %16 = math.tanh %15 : vector<16x128xf32>
    %cst_8 = arith.constant 1.000000e+00 : f32
    %17 = vector.broadcast %cst_8 : f32 to vector<16x128xf32>
    %18 = arith.addf %17, %16 : vector<16x128xf32>
    %19 = arith.mulf %8, %18 : vector<16x128xf32>
    %20 = arith.truncf %19 : vector<16x128xf32> to vector<16x128xbf16>
    %c0_9 = arith.constant 0 : index
    %c0_10 = arith.constant 0 : index
    %21 = vector.load %arg4[%c0_9, %c0_10] : memref<128x32xbf16, #tpu.memory_space<vmem>>, vector<128x32xbf16>
    %cst_11 = arith.constant dense<0.000000e+00> : vector<16x32xf32>
    %22 = tpu.matmul %20, %21, %cst_11 {dimension_numbers = #tpu.dot_dimension_numbers<[1], [0], [0], [1], [0, 0, 1, 1], [], []>} : vector<16x128xbf16>, vector<128x32xbf16>, vector<16x32xf32> -> vector<16x32xf32>
    %c0_12 = arith.constant 0 : index
    %c0_13 = arith.constant 0 : index
    %23 = vector.load %arg5[%c0_12, %c0_13] : memref<1x32xf32, #tpu.memory_space<vmem>>, vector<1x32xf32>
    %24 = vector.broadcast %23 : vector<1x32xf32> to vector<16x32xf32>
    %25 = arith.addf %22, %24 : vector<16x32xf32>
    %c0_14 = arith.constant 0 : index
    %c0_15 = arith.constant 0 : index
    %26 = vector.load %arg6[%c0_14, %c0_15] : memref<16x32xf32, #tpu.memory_space<vmem>>, vector<16x32xf32>
    tpu.vector_store %arg6[%c0_14, %c0_15], %25 {strides = array<i32>} : memref<16x32xf32, #tpu.memory_space<vmem>>, vector<16x32xf32>,
    return
  }
  func.func @transform_0(%arg0: i32) -> (i32, i32) {
    %c0_i32 = arith.constant 0 : i32
    %c0_i32_0 = arith.constant 0 : i32
    return %arg0, %c0_i32 : i32, i32
  }
  func.func @transform_1(%arg0: i32) -> (i32, i32) {
    %c0_i32 = arith.constant 0 : i32
    %c0_i32_0 = arith.constant 0 : i32
    %c0_i32_1 = arith.constant 0 : i32
    return %c0_i32, %c0_i32_0 : i32, i32
  }
  func.func @transform_2(%arg0: i32) -> (i32, i32) {
    %c0_i32 = arith.constant 0 : i32
    %c0_i32_0 = arith.constant 0 : i32
    %c0_i32_1 = arith.constant 0 : i32
    return %c0_i32, %c0_i32_0 : i32, i32
  }
  func.func @transform_3(%arg0: i32) -> (i32, i32) {
    %c0_i32 = arith.constant 0 : i32
    %c0_i32_0 = arith.constant 0 : i32
    %c0_i32_1 = arith.constant 0 : i32
    return %c0_i32, %c0_i32_0 : i32, i32
  }
  func.func @transform_4(%arg0: i32) -> (i32, i32) {
    %c0_i32 = arith.constant 0 : i32
    %c0_i32_0 = arith.constant 0 : i32
    %c0_i32_1 = arith.constant 0 : i32
    return %c0_i32, %c0_i32_0 : i32, i32
  }
  func.func @transform_5(%arg0: i32) -> (i32, i32) {
    %c0_i32 = arith.constant 0 : i32
    %c0_i32_0 = arith.constant 0 : i32
    return %arg0, %c0_i32 : i32, i32
  }
}

</mosaic_0001>

<llo_original>
// kernel: tpu_custom_call.1
$region0: #{tpu_custom_call.1}
  #allocation0 [shape = 'u32[]', space=smem, size = 0x4, offset = 0x4, fixed_abs, tag = 'smem constant byte address 0x4 - core index']
  #allocation1 [shape = 'u32[144,128]{1,0:T(1,128)}', space=vmem, size = 0x12000, scoped, tag = 'internal scratch']
  %s0 = inlined_call_operand.vmem [shape: f32[16,32], index: 0, kind: input, shape index: {}]
  %s1 = inlined_call_operand.vmem [shape: bf16[32,128], index: 1, kind: input, shape index: {}]
  %s2 = inlined_call_operand.vmem [shape: f32[1,128], index: 2, kind: input, shape index: {}]
  %s3 = inlined_call_operand.vmem [shape: bf16[128,32], index: 3, kind: input, shape index: {}]
  %s4 = inlined_call_operand.vmem [shape: f32[1,32], index: 4, kind: input, shape index: {}]
  %s5 = inlined_call_operand.hbm [shape: f32[16,32], index: 5, kind: output, shape index: {}]
  %s6 = sld [smem:[#allocation0]]
  $region30: #{tpu_custom_call.1} parent=0
    _
  %s8 = ssub.s32 1, %s6
  %s9 = scalar_select 0, %s8, %s6
  $region1: #{tpu_custom_call.1} parent=0
    #allocation2 [shape = 'u8[8192]{0}', space=vmem, size = 0x2000, scoped, tag = 'output window, operand 0, single buffered']
    #allocation3 [shape = 's32[1]{0}', space=sflag, size = 0x4, scoped, tag = 'scoped memory for tpu_custom_call.1']
    %10 = vsyncpa [#allocation3], 0
    // Predicated region
    $region2: #{tpu_custom_call.1} parent=1 // pred_check
      _
    $region3: #{tpu_custom_call.1} parent=1 // pred_check_branch
      %12 = sbr.rel (0) target = $region5
    $region4: #{tpu_custom_call.1} parent=1 // pred_region
      _
    $region5: #{tpu_custom_call.1} parent=1 // pred_fallthru
      _
    // Predicated region
    $region6: #{tpu_custom_call.1} parent=1 // pred_check
      _
    $region7: #{tpu_custom_call.1} parent=1 // pred_check_branch
      %14 = sbr.rel (0) target = $region9
    $region8: #{tpu_custom_call.1} parent=1 // pred_region
      _
    $region9: #{tpu_custom_call.1} parent=1 // pred_fallthru
      _
    // Predicated region
    $region10: #{tpu_custom_call.1} parent=1 // pred_check
      _
    $region11: #{tpu_custom_call.1} parent=1 // pred_check_branch
      %16 = sbr.rel (0) target = $region13
    $region12: #{tpu_custom_call.1} parent=1 // pred_region
      _
    $region13: #{tpu_custom_call.1} parent=1 // pred_fallthru
      _
    // Predicated region
    $region14: #{tpu_custom_call.1} parent=1 // pred_check
      _
    $region15: #{tpu_custom_call.1} parent=1 // pred_check_branch
      %18 = sbr.rel (0) target = $region17
    $region16: #{tpu_custom_call.1} parent=1 // pred_region
      _
    $region17: #{tpu_custom_call.1} parent=1 // pred_fallthru
      _
    // Predicated region
    $region18: #{tpu_custom_call.1} parent=1 // pred_check
      _
    $region19: #{tpu_custom_call.1} parent=1 // pred_check_branch
      %20 = sbr.rel (0) target = $region21
    $region20: #{tpu_custom_call.1} parent=1 // pred_region
      _
    $region21: #{tpu_custom_call.1} parent=1 // pred_fallthru
      _
    %v22 = vld [vmem:[%s0] sm:$0xff]
    %v23 = vld [vmem:[%s0 + $0x8] sm:$0xff]
    %v24 = vpack.c.bf16 %v23, %v22
    %v25 = vld [vmem:[%s1] sm:$0xf]
    %v26 = vld [vmem:[%s1 + $0x4] sm:$0xf]
    %v27 = vld [vmem:[%s1 + $0x8] sm:$0xf]
    %v28 = vld [vmem:[%s1 + $0xc] sm:$0xf]
    %v29 = vld [vmem:[%s2] sm:$0x1]
    %v31 = vlaneseq
    %v32 = vshrl.u32 %v31, 7
    %v33 = vsub.s32 0, %v32
    %v34 = vrot.slane %v29, %v33
    %v40 = vunpack.c.l.b16 %v25
    %v41 = vunpack.c.l.b16 %v26
    %v42 = vunpack.c.l.b16 %v27
    %v43 = vunpack.c.l.b16 %v28
    %v44 = vpack.c.b16 %v41, %v40
    %v45 = vpack.c.b16 %v43, %v42
    %vm48 = vcmask 261120
    %v50 = vsel %vm48, %v24, 0
    %52 = vmatprep.subr.bf16.mxu0 0
    %53 = vmatpush1.bf16.msra.mxu0 0
    %54 = vmatprep.subr.bf16.mxu0 0
    %55 = vmatpush1.bf16.msra.mxu0 0
    %56 = vmatprep.subr.bf16.mxu0 0
    %57 = vmatpush1.bf16.msra.mxu0 0
    %58 = vmatprep.subr.bf16.mxu0 0
    %59 = vmatpush1.bf16.msra.mxu0 0
    %60 = vmatprep.subr.bf16.mxu0 0
    %61 = vmatpush1.bf16.msra.mxu0 0
    %62 = vmatprep.subr.bf16.mxu0 0
    %63 = vmatpush1.bf16.msra.mxu0 0
    %64 = vmatprep.subr.bf16.mxu0 0
    %65 = vmatpush1.bf16.msra.mxu0 %v45
    %66 = vmatprep.subr.bf16.mxu0 0
    %67 = vmatpush1.bf16.msra.mxu0 %v44
    %68 = vmatprep.subr.bf16.mxu0 0
    %69 = vmatpush2.bf16.msra.mxu0 0
    %70 = vmatprep.subr.bf16.mxu0 0
    %71 = vmatpush2.bf16.msra.mxu0 0
    %72 = vmatprep.subr.bf16.mxu0 0
    %73 = vmatpush2.bf16.msra.mxu0 0
    %74 = vmatprep.subr.bf16.mxu0 0
    %75 = vmatpush2.bf16.msra.mxu0 0
    %76 = vmatprep.subr.bf16.mxu0 0
    %77 = vmatpush2.bf16.msra.mxu0 0
    %78 = vmatprep.subr.bf16.mxu0 0
    %79 = vmatpush2.bf16.msra.mxu0 0
    %80 = vmatprep.subr.bf16.mxu0 0
    %81 = vmatpush2.bf16.msra.mxu0 0
    %82 = vmatprep.subr.bf16.mxu0 0
    %83 = vmatpush2.bf16.msra.mxu0 0
    %84 = vmatprep.mubr.bf16.mxu0 0
    %85 = vmatmul.mubr.bf16.gmra.mxu0 %v50
    %v86 = vpop.f32.mrf.mxu0
    %v87 = vadd.f32 %v34, %v86
    %v88 = vpop.f32.mrf.mxu0
    %v89 = vpop.f32.mrf.mxu0
    %v90 = vadd.f32 %v34, %v89
    %v91 = vpop.f32.mrf.mxu0
    %92 = vdwg.mxu0
    %v93 = vmul.f32 %v87, 0.5
    %v94 = vmul.f32 %v90, 0.5
    %v95 = vmul.f32 %v87, 0.044715
    %v96 = vmul.f32 %v90, 0.044715
    %v97 = vmul.f32 %v95, %v87
    %v98 = vmul.f32 %v96, %v90
    %v99 = vmul.f32 %v97, %v87
    %v100 = vmul.f32 %v98, %v90
    %v101 = vadd.f32 %v87, %v99
    %v102 = vadd.f32 %v90, %v100
    %v103 = vmul.f32 %v101, 0.7978846
    %v104 = vmul.f32 %v102, 0.7978846
    %v105 = vtanh.pop %v103
    %v106 = vtanh.pop %v104
    %v107 = vadd.f32 %v105, 1.0
    %v108 = vadd.f32 %v106, 1.0
    %v109 = vmul.f32 %v93, %v107
    %v110 = vmul.f32 %v94, %v108
    %v111 = vpack.c.bf16 %v110, %v109
    %v112 = vld [vmem:[%s3] sm:$0xf]
    %v113 = vld [vmem:[%s3 + $0x4] sm:$0xf]
    %v114 = vld [vmem:[%s3 + $0x8] sm:$0xf]
    %v115 = vld [vmem:[%s3 + $0xc] sm:$0xf]
    %v116 = vld [vmem:[%s3 + $0x10] sm:$0xf]
    %v117 = vld [vmem:[%s3 + $0x14] sm:$0xf]
    %v118 = vld [vmem:[%s3 + $0x18] sm:$0xf]
    %v119 = vld [vmem:[%s3 + $0x1c] sm:$0xf]
    %v120 = vld [vmem:[%s3 + $0x20] sm:$0xf]
    %v121 = vld [vmem:[%s3 + $0x24] sm:$0xf]
    %v122 = vld [vmem:[%s3 + $0x28] sm:$0xf]
    %v123 = vld [vmem:[%s3 + $0x2c] sm:$0xf]
    %v124 = vld [vmem:[%s3 + $0x30] sm:$0xf]
    %v125 = vld [vmem:[%s3 + $0x34] sm:$0xf]
    %v126 = vld [vmem:[%s3 + $0x38] sm:$0xf]
    %v127 = vld [vmem:[%s3 + $0x3c] sm:$0xf]
    %v128 = vld [vmem:[%s4] sm:$0x1]
    %v130 = vlaneseq
    %v131 = vshrl.u32 %v130, 7
    %v132 = vsub.s32 0, %v131
    %v133 = vrot.slane %v128, %v132
    %v151 = vunpack.c.l.b16 %v112
    %v152 = vunpack.c.l.b16 %v113
    %v153 = vunpack.c.l.b16 %v114
    %v154 = vunpack.c.l.b16 %v115
    %v155 = vunpack.c.l.b16 %v116
    %v156 = vunpack.c.l.b16 %v117
    %v157 = vunpack.c.l.b16 %v118
    %v158 = vunpack.c.l.b16 %v119
    %v159 = vunpack.c.l.b16 %v120
    %v160 = vunpack.c.l.b16 %v121
    %v161 = vunpack.c.l.b16 %v122
    %v162 = vunpack.c.l.b16 %v123
    %v163 = vunpack.c.l.b16 %v124
    %v164 = vunpack.c.l.b16 %v125
    %v165 = vunpack.c.l.b16 %v126
    %v166 = vunpack.c.l.b16 %v127
    %v167 = vpack.c.b16 %v152, %v151
    %v168 = vpack.c.b16 %v154, %v153
    %v169 = vpack.c.b16 %v156, %v155
    %v170 = vpack.c.b16 %v158, %v157
    %v171 = vpack.c.b16 %v160, %v159
    %v172 = vpack.c.b16 %v162, %v161
    %v173 = vpack.c.b16 %v164, %v163
    %v174 = vpack.c.b16 %v166, %v165
    %183 = vmatprep.subr.bf16.mxu0 0
    %184 = vmatpush1.bf16.msra.mxu0 %v174
    %185 = vmatprep.subr.bf16.mxu0 0
    %186 = vmatpush1.bf16.msra.mxu0 %v173
    %187 = vmatprep.subr.bf16.mxu0 0
    %188 = vmatpush1.bf16.msra.mxu0 %v172
    %189 = vmatprep.subr.bf16.mxu0 0
    %190 = vmatpush1.bf16.msra.mxu0 %v171
    %191 = vmatprep.subr.bf16.mxu0 0
    %192 = vmatpush1.bf16.msra.mxu0 %v170
    %193 = vmatprep.subr.bf16.mxu0 0
    %194 = vmatpush1.bf16.msra.mxu0 %v169
    %195 = vmatprep.subr.bf16.mxu0 0
    %196 = vmatpush1.bf16.msra.mxu0 %v168
    %197 = vmatprep.subr.bf16.mxu0 0
    %198 = vmatpush1.bf16.msra.mxu0 %v167
    %199 = vmatprep.subr.bf16.mxu0 0
    %200 = vmatpush2.bf16.msra.mxu0 0
    %201 = vmatprep.subr.bf16.mxu0 0
    %202 = vmatpush2.bf16.msra.mxu0 0
    %203 = vmatprep.subr.bf16.mxu0 0
    %204 = vmatpush2.bf16.msra.mxu0 0
    %205 = vmatprep.subr.bf16.mxu0 0
    %206 = vmatpush2.bf16.msra.mxu0 0
    %207 = vmatprep.subr.bf16.mxu0 0
    %208 = vmatpush2.bf16.msra.mxu0 0
    %209 = vmatprep.subr.bf16.mxu0 0
    %210 = vmatpush2.bf16.msra.mxu0 0
    %211 = vmatprep.subr.bf16.mxu0 0
    %212 = vmatpush2.bf16.msra.mxu0 0
    %213 = vmatprep.subr.bf16.mxu0 0
    %214 = vmatpush2.bf16.msra.mxu0 0
    %215 = vmatprep.mubr.bf16.mxu0 0
    %216 = vmatmul.mubr.bf16.gmra.mxu0 %v111
    %v217 = vpop.f32.mrf.mxu0
    %v218 = vadd.f32 %v133, %v217
    %v219 = vpop.f32.mrf.mxu0
    %v220 = vpop.f32.mrf.mxu0
    %v221 = vadd.f32 %v133, %v220
    %v222 = vpop.f32.mrf.mxu0
    %223 = vdwg.mxu0
    %224 = vst.msk [vmem:[#allocation2] sm:$0xff] %vm48, %v218
    %225 = vst.msk [vmem:[#allocation2 + $0x8] sm:$0xff] %vm48, %v221
    // Predicated region
    $region22: #{tpu_custom_call.1} parent=1 // pred_check
      _
    $region23: #{tpu_custom_call.1} parent=1 // pred_check_branch
      %227 = sbr.rel (0) target = $region25
    $region24: #{tpu_custom_call.1} parent=1 // pred_region
      %s229 = ssub.s32 256, 256
      %230 = vsyncadd [#allocation3], %s229
      %s231 = sshll.u32 [#allocation2], 4
      %s232 = int_to_ptr.vmem [resolvable:$true] %s231
      %237 = dma.vmem_to_hbm [thread:$0]  %s232, 256, %s5, [#allocation3], 128, 128, 8
    $region25: #{tpu_custom_call.1} parent=1 // pred_fallthru
      _
    // Predicated region
    $region26: #{tpu_custom_call.1} parent=1 // pred_check
      _
    $region27: #{tpu_custom_call.1} parent=1 // pred_check_branch
      %239 = sbr.rel (0) target = $region29
    $region28: #{tpu_custom_call.1} parent=1 // pred_region
      %240 = dma.done [#allocation3], 256
    $region29: #{tpu_custom_call.1} parent=1 // pred_fallthru
      _
    %241 = vsyncpa [#allocation3], 1

</llo_original>
